<compile_context>
chip_gen: v6e
topology: v6e:2x2x1
jax: 0.10.0
libtpu: 0.0.40
codegen_flags: <defaults>
</compile_context>

<pallas_src>
import jax
import jax.numpy as jnp
from jax.experimental import pallas as pl
from jax.experimental.pallas import tpu as pltpu  # noqa: F401  (imported per spec)

# ---- model dimensions (small, consistent with the module's forward) ----
B, S, H, F, VOCAB = 2, 8, 32, 64, 100
OUT_EMB = 10            # output_embedding_shape
BS = B * S              # flattened tokens
LANE = 128

# lane offsets of the 128-aligned blocks inside the packed weight slab
OFF_Q, OFF_K, OFF_V, OFF_O, OFF_F1, OFF_DR = 0, 128, 256, 384, 512, 640
W_LANES = 768

# row indices inside the packed small-vector slab
(R_BQ, R_BK, R_BV, R_BO, R_G1, R_B1, R_BF1, R_BF2, R_G2, R_B2,
 R_BDR, R_WREG, R_BREG, R_SEL0, R_SEL1) = range(15)
VEC_ROWS = 16

INV_SQRT_H = 1.0 / float(H) ** 0.5


# ---------------------------------------------------------------------------
# Single fused kernel: encoder layer + pooling + regression head + MSE loss
# ---------------------------------------------------------------------------
def _fused_kernel(x_ref, w_ref, wf2_ref, vec_ref, dyn_ref, out_ref):
    x = x_ref[...]                                                 # (16, 32)

    # fused QKV projection: one MXU push against three 128-lane-aligned blocks
    qkv = jnp.dot(x, w_ref[:, 0:3 * LANE],
                  preferred_element_type=jnp.float32)              # (16, 384)
    # q/k/v views start at vreg boundaries -> relayout-free
    q = qkv[:, OFF_Q:OFF_Q + H] + vec_ref[R_BQ:R_BQ + 1, 0:H]      # (16, 32)
    k = qkv[:, OFF_K:OFF_K + H] + vec_ref[R_BK:R_BK + 1, 0:H]
    v = qkv[:, OFF_V:OFF_V + H] + vec_ref[R_BV:R_BV + 1, 0:H]

    # batched single-head attention: both batches in one (16,16) score block;
    # precomputed additive mask (block-diag over batch + key padding) is a
    # single VPU add.
    scores = jnp.dot(q, k.T, preferred_element_type=jnp.float32) * INV_SQRT_H
    scores = scores + dyn_ref[:, 0:BS]                             # (16, 16)
    scores = scores - jnp.max(scores, axis=-1, keepdims=True)
    p = jnp.exp(scores)
    p = p * pl.reciprocal(jnp.sum(p, axis=-1, keepdims=True), approx=True)
    attn = jnp.dot(p, v, preferred_element_type=jnp.float32)       # (16, 32)

    attn = jnp.dot(attn, w_ref[:, OFF_O:OFF_O + H],
                   preferred_element_type=jnp.float32) + vec_ref[R_BO:R_BO + 1, 0:H]

    def layer_norm(y, g, b):
        mu = jnp.mean(y, axis=-1, keepdims=True)
        var = jnp.mean((y - mu) * (y - mu), axis=-1, keepdims=True)
        return (y - mu) * jax.lax.rsqrt(var + 1e-5) * g + b

    h1 = layer_norm(x + attn,
                    vec_ref[R_G1:R_G1 + 1, 0:H], vec_ref[R_B1:R_B1 + 1, 0:H])

    ff = jnp.dot(h1, w_ref[:, OFF_F1:OFF_F1 + F],
                 preferred_element_type=jnp.float32) + vec_ref[R_BF1:R_BF1 + 1, 0:F]
    ff = jax.nn.gelu(ff)                                           # tanh approx
    ff = jnp.dot(ff, wf2_ref[...],
                 preferred_element_type=jnp.float32) + vec_ref[R_BF2:R_BF2 + 1, 0:H]

    h2 = layer_norm(h1 + ff,
                    vec_ref[R_G2:R_G2 + 1, 0:H], vec_ref[R_B2:R_B2 + 1, 0:H])  # (16,32)

    # CLS pooling (rows b*S) via one-hot MXU select -- no sublane gather/concat
    sel = vec_ref[R_SEL0:R_SEL1 + 1, 0:BS]                         # (2, 16)
    pooled = jnp.dot(sel, h2, preferred_element_type=jnp.float32)  # (2, 32)

    # dim_reduction_layer; dr kept 128-lane dense (lanes >= 10 are exactly 0
    # because the wdr block and bdr row are zero-padded).
    dr = jnp.dot(pooled, w_ref[:, OFF_DR:OFF_DR + LANE],
                 preferred_element_type=jnp.float32) + vec_ref[R_BDR:R_BDR + 1, :]  # (2,128)

    # regression_layer: logits = dr[:, :10] @ wreg + breg, done as a lane
    # reduction against the packed wreg row (both are zero beyond lane 10).
    logits = jnp.sum(dr * vec_ref[R_WREG:R_WREG + 1, :], axis=-1, keepdims=True) \
        + vec_ref[R_BREG:R_BREG + 1, 0:1]                          # (2, 1)

    labels = dyn_ref[0:B, BS:BS + 1]                               # (2, 1)
    diff = logits - labels
    loss = jnp.sum(diff * diff, keepdims=True) * (1.0 / B)         # (1, 1)

    # single lane-dense (8,128) output slab -> one unmasked writeback DMA
    out_ref[0:2, :] = dr
    out_ref[2:4, :] = jnp.broadcast_to(logits, (2, LANE))
    out_ref[4:8, :] = jnp.broadcast_to(loss, (4, LANE))


def fused_forward_kernel(x2d, w_slab, wf2, vec_slab, dyn_slab):
    # No grid: single invocation, every operand mapped whole into VMEM.
    return pl.pallas_call(
        _fused_kernel,
        out_shape=jax.ShapeDtypeStruct((8, LANE), jnp.float32),
    )(x2d, w_slab, wf2, vec_slab, dyn_slab)


# ---------------------------------------------------------------------------
# Parameters (deterministic synthetic init) + one-time packing + full forward
# ---------------------------------------------------------------------------
def init_params(key):
    ks = jax.random.split(key, 12)
    s = 0.02
    n = lambda k, shape: (jax.random.normal(k, shape, jnp.float32) * s)
    return {
        "tok_emb": n(ks[0], (VOCAB, H)),
        "pos_emb": n(ks[1], (S, H)),
        "wq": n(ks[2], (H, H)), "bq": jnp.zeros((1, H), jnp.float32),
        "wk": n(ks[3], (H, H)), "bk": jnp.zeros((1, H), jnp.float32),
        "wv": n(ks[4], (H, H)), "bv": jnp.zeros((1, H), jnp.float32),
        "wo": n(ks[5], (H, H)), "bo": jnp.zeros((1, H), jnp.float32),
        "g1": jnp.ones((1, H), jnp.float32), "be1": jnp.zeros((1, H), jnp.float32),
        "wf1": n(ks[6], (H, F)), "bf1": jnp.zeros((1, F), jnp.float32),
        "wf2": n(ks[7], (F, H)), "bf2": jnp.zeros((1, H), jnp.float32),
        "g2": jnp.ones((1, H), jnp.float32), "be2": jnp.zeros((1, H), jnp.float32),
        "wdr": n(ks[8], (H, OUT_EMB)), "bdr": jnp.zeros((1, OUT_EMB), jnp.float32),
        "wreg": n(ks[9], (OUT_EMB, 1)), "breg": jnp.zeros((1, 1), jnp.float32),
    }


def pack_static(params):
    """One-time packing of all static parameters into lane-aligned slabs.

    Hoisted out of forward() so no per-call XLA concat/pad ops remain.
    """
    W = jnp.zeros((H, W_LANES), jnp.float32)
    W = W.at[:, OFF_Q:OFF_Q + H].set(params["wq"])
    W = W.at[:, OFF_K:OFF_K + H].set(params["wk"])
    W = W.at[:, OFF_V:OFF_V + H].set(params["wv"])
    W = W.at[:, OFF_O:OFF_O + H].set(params["wo"])
    W = W.at[:, OFF_F1:OFF_F1 + F].set(params["wf1"])
    W = W.at[:, OFF_DR:OFF_DR + OUT_EMB].set(params["wdr"])

    V = jnp.zeros((VEC_ROWS, LANE), jnp.float32)
    V = V.at[R_BQ, 0:H].set(params["bq"][0])
    V = V.at[R_BK, 0:H].set(params["bk"][0])
    V = V.at[R_BV, 0:H].set(params["bv"][0])
    V = V.at[R_BO, 0:H].set(params["bo"][0])
    V = V.at[R_G1, 0:H].set(params["g1"][0])
    V = V.at[R_B1, 0:H].set(params["be1"][0])
    V = V.at[R_BF1, 0:F].set(params["bf1"][0])
    V = V.at[R_BF2, 0:H].set(params["bf2"][0])
    V = V.at[R_G2, 0:H].set(params["g2"][0])
    V = V.at[R_B2, 0:H].set(params["be2"][0])
    V = V.at[R_BDR, 0:OUT_EMB].set(params["bdr"][0])
    V = V.at[R_WREG, 0:OUT_EMB].set(params["wreg"][:, 0])
    V = V.at[R_BREG, 0].set(params["breg"][0, 0])
    V = V.at[R_SEL0, 0 * S].set(1.0)     # CLS row of batch 0 = flat row 0
    V = V.at[R_SEL1, 1 * S].set(1.0)     # CLS row of batch 1 = flat row S

    return {
        "tok_emb": params["tok_emb"], "pos_emb": params["pos_emb"],
        "w_slab": W, "wf2": params["wf2"], "vec_slab": V,
    }


def forward(packed, input_ids, attention_mask, labels=None):
    # --- glue: embedding lookup (data-dependent gather stays in XLA) ---
    x = packed["tok_emb"][input_ids] + packed["pos_emb"][None, :, :]   # (B, S, H)
    x2d = x.reshape(BS, H)

    # additive attention bias: block-diagonal over batch + key-padding mask,
    # precomputed so the kernel does a single add
    batch_of = jnp.arange(BS) // S
    same_batch = batch_of[:, None] == batch_of[None, :]
    keep_key = attention_mask.reshape(BS).astype(bool)
    bias = jnp.where(same_batch & keep_key[None, :], 0.0, -1e9).astype(jnp.float32)

    labels_col = jnp.zeros((BS, 1), jnp.float32)
    if labels is not None:
        labels_col = labels_col.at[0:B, 0].set(labels.astype(jnp.float32).reshape(B))
    dyn = jnp.concatenate([bias, labels_col], axis=1)                  # (16, 17)

    slab = fused_forward_kernel(x2d, packed["w_slab"], packed["wf2"],
                                packed["vec_slab"], dyn)               # (8, 128)

    dim_reduced = slab[0:B, 0:OUT_EMB]                                 # (B, 10)
    logits = slab[2:2 + B, 0:1]                                        # (B, 1)

    out = {
        "logits": logits,
        "last_hidden_state": dim_reduced,  # dim-reduced output, as in the torch module
        "hidden_states": None,             # TODO(synk): synthetic base_model does not expose hidden_states
        "attentions": None,                # TODO(synk): synthetic base_model does not expose attentions
    }
    if labels is not None:
        out["loss"] = slab[4, 0]
    return out


# ---------------------------------------------------------------------------
# Pure-JAX reference (same math) for a sanity check
# ---------------------------------------------------------------------------
def forward_ref(params, input_ids, attention_mask, labels):
    x = params["tok_emb"][input_ids] + params["pos_emb"][None, :, :]
    m = attention_mask.astype(jnp.float32)[:, None, :]                  # (B,1,S)

    def ln(y, g, b):
        mu = jnp.mean(y, axis=-1, keepdims=True)
        var = jnp.mean((y - mu) ** 2, axis=-1, keepdims=True)
        return (y - mu) * jax.lax.rsqrt(var + 1e-5) * g + b

    q = x @ params["wq"] + params["bq"]
    k = x @ params["wk"] + params["bk"]
    v = x @ params["wv"] + params["bv"]
    sc = jnp.einsum("bqh,bkh->bqk", q, k) / jnp.sqrt(jnp.float32(H))
    sc = sc + (1.0 - m) * (-1e9)
    p = jax.nn.softmax(sc, axis=-1)
    attn = jnp.einsum("bqk,bkh->bqh", p, v) @ params["wo"] + params["bo"]
    h1 = ln(x + attn, params["g1"], params["be1"])
    ff = jax.nn.gelu(h1 @ params["wf1"] + params["bf1"]) @ params["wf2"] + params["bf2"]
    h2 = ln(h1 + ff, params["g2"], params["be2"])

    pooled = h2[:, 0, :]
    dr = pooled @ params["wdr"] + params["bdr"]
    logits = dr @ params["wreg"] + params["breg"]
    loss = jnp.mean((logits.flatten() - labels.flatten()) ** 2)
    return dr, logits, loss


if __name__ == "__main__":
    key = jax.random.PRNGKey(0)
    kp, ki, km, kl = jax.random.split(key, 4)

    params = init_params(kp)
    packed = pack_static(params)   # hoisted: packed once, reused every call

    input_ids = jax.random.randint(ki, (B, S), 0, VOCAB, dtype=jnp.int32)
    attention_mask = jnp.array([[1, 1, 1, 1, 1, 1, 1, 1],
                                [1, 1, 1, 1, 1, 1, 0, 0]], dtype=jnp.int32)
    labels = jax.random.normal(kl, (B,), jnp.float32)

    out = forward(packed, input_ids, attention_mask, labels)
    jax.block_until_ready(out)

    dr_ref, logits_ref, loss_ref = forward_ref(params, input_ids, attention_mask, labels)
    assert jnp.allclose(out["last_hidden_state"], dr_ref, atol=1e-2), "dim_reduced mismatch"
    assert jnp.allclose(out["logits"], logits_ref, atol=1e-2), "logits mismatch"
    assert jnp.allclose(out["loss"], loss_ref, atol=1e-2), "loss mismatch"

    print("KERNEL_OK")
</pallas_src>

<mosaic_0001>
module attributes {stable_mosaic.version = 11 : i64} {
  func.func @_fused_kernel(%arg0: memref<16x32xf32, #tpu.memory_space<vmem>>, %arg1: memref<32x768xf32, #tpu.memory_space<vmem>>, %arg2: memref<64x32xf32, #tpu.memory_space<vmem>>, %arg3: memref<16x128xf32, #tpu.memory_space<vmem>>, %arg4: memref<16x17xf32, #tpu.memory_space<vmem>>, %arg5: memref<8x128xf32, #tpu.memory_space<vmem>>) attributes {dimension_semantics = [], scalar_prefetch = 0 : i64, scratch_operands = 0 : i64, tpu.core_type = #tpu.core_type<tc>} {
    %c0 = arith.constant 0 : index
    %c0_0 = arith.constant 0 : index
    %0 = vector.load %arg0[%c0, %c0_0] : memref<16x32xf32, #tpu.memory_space<vmem>>, vector<16x32xf32>
    %c0_1 = arith.constant 0 : index
    %c0_2 = arith.constant 0 : index
    %1 = vector.load %arg1[%c0_1, %c0_2] : memref<32x768xf32, #tpu.memory_space<vmem>>, vector<32x384xf32>
    %cst = arith.constant dense<0.000000e+00> : vector<16x384xf32>
    %2 = tpu.matmul %0, %1, %cst {dimension_numbers = #tpu.dot_dimension_numbers<[1], [0], [0], [1], [0, 0, 1, 1], [], []>} : vector<16x32xf32>, vector<32x384xf32>, vector<16x384xf32> -> vector<16x384xf32>
    %3 = vector.extract_strided_slice %2 {offsets = [0, 0], sizes = [16, 32], strides = [1, 1]} : vector<16x384xf32> to vector<16x32xf32>
    %c0_3 = arith.constant 0 : index
    %c0_4 = arith.constant 0 : index
    %4 = vector.load %arg3[%c0_3, %c0_4] : memref<16x128xf32, #tpu.memory_space<vmem>>, vector<1x32xf32>
    %5 = vector.broadcast %4 : vector<1x32xf32> to vector<16x32xf32>
    %6 = arith.addf %3, %5 : vector<16x32xf32>
    %7 = vector.extract_strided_slice %2 {offsets = [0, 128], sizes = [16, 32], strides = [1, 1]} : vector<16x384xf32> to vector<16x32xf32>
    %c1 = arith.constant 1 : index
    %c0_5 = arith.constant 0 : index
    %8 = vector.load %arg3[%c1, %c0_5] : memref<16x128xf32, #tpu.memory_space<vmem>>, vector<1x32xf32>
    %9 = vector.broadcast %8 : vector<1x32xf32> to vector<16x32xf32>
    %10 = arith.addf %7, %9 : vector<16x32xf32>
    %11 = vector.extract_strided_slice %2 {offsets = [0, 256], sizes = [16, 32], strides = [1, 1]} : vector<16x384xf32> to vector<16x32xf32>
    %c2 = arith.constant 2 : index
    %c0_6 = arith.constant 0 : index
    %12 = vector.load %arg3[%c2, %c0_6] : memref<16x128xf32, #tpu.memory_space<vmem>>, vector<1x32xf32>
    %13 = vector.broadcast %12 : vector<1x32xf32> to vector<16x32xf32>
    %14 = arith.addf %11, %13 : vector<16x32xf32>
    %15 = tpu.transpose %10, [1, 0] : vector<16x32xf32> -> vector<32x16xf32>
    %cst_7 = arith.constant dense<0.000000e+00> : vector<16x16xf32>
    %16 = tpu.matmul %6, %15, %cst_7 {dimension_numbers = #tpu.dot_dimension_numbers<[1], [0], [0], [1], [0, 0, 1, 1], [], []>} : vector<16x32xf32>, vector<32x16xf32>, vector<16x16xf32> -> vector<16x16xf32>
    %cst_8 = arith.constant 0.176776692 : f32
    %17 = vector.broadcast %cst_8 : f32 to vector<16x16xf32>
    %18 = arith.mulf %16, %17 : vector<16x16xf32>
    %c0_9 = arith.constant 0 : index
    %c0_10 = arith.constant 0 : index
    %19 = vector.load %arg4[%c0_9, %c0_10] : memref<16x17xf32, #tpu.memory_space<vmem>>, vector<16x16xf32>
    %20 = arith.addf %18, %19 : vector<16x16xf32>
    %cst_11 = arith.constant dense<0xFF800000> : vector<16xf32>
    %21 = vector.multi_reduction <maximumf>, %20, %cst_11 [1] : vector<16x16xf32> to vector<16xf32>
    %22 = vector.shape_cast %21 : vector<16xf32> to vector<16x1xf32>
    %23 = vector.broadcast %22 : vector<16x1xf32> to vector<16x16xf32>
    %24 = arith.subf %20, %23 : vector<16x16xf32>
    %25 = math.exp %24 : vector<16x16xf32>
    %cst_12 = arith.constant dense<0.000000e+00> : vector<16xf32>
    %26 = vector.multi_reduction <add>, %25, %cst_12 [1] : vector<16x16xf32> to vector<16xf32>
    %27 = vector.shape_cast %26 : vector<16xf32> to vector<16x1xf32>
    %28 = tpu.reciprocal %27 {approx = true} : vector<16x1xf32> -> vector<16x1xf32>
    %29 = vector.broadcast %28 : vector<16x1xf32> to vector<16x16xf32>
    %30 = arith.mulf %25, %29 : vector<16x16xf32>
    %cst_13 = arith.constant dense<0.000000e+00> : vector<16x32xf32>
    %31 = tpu.matmul %30, %14, %cst_13 {dimension_numbers = #tpu.dot_dimension_numbers<[1], [0], [0], [1], [0, 0, 1, 1], [], []>} : vector<16x16xf32>, vector<16x32xf32>, vector<16x32xf32> -> vector<16x32xf32>
    %c0_14 = arith.constant 0 : index
    %c384 = arith.constant 384 : index
    %32 = vector.load %arg1[%c0_14, %c384] : memref<32x768xf32, #tpu.memory_space<vmem>>, vector<32x32xf32>
    %cst_15 = arith.constant dense<0.000000e+00> : vector<16x32xf32>
    %33 = tpu.matmul %31, %32, %cst_15 {dimension_numbers = #tpu.dot_dimension_numbers<[1], [0], [0], [1], [0, 0, 1, 1], [], []>} : vector<16x32xf32>, vector<32x32xf32>, vector<16x32xf32> -> vector<16x32xf32>
    %c3 = arith.constant 3 : index
    %c0_16 = arith.constant 0 : index
    %34 = vector.load %arg3[%c3, %c0_16] : memref<16x128xf32, #tpu.memory_space<vmem>>, vector<1x32xf32>
    %35 = vector.broadcast %34 : vector<1x32xf32> to vector<16x32xf32>
    %36 = arith.addf %33, %35 : vector<16x32xf32>
    %37 = arith.addf %0, %36 : vector<16x32xf32>
    %c4 = arith.constant 4 : index
    %c0_17 = arith.constant 0 : index
    %38 = vector.load %arg3[%c4, %c0_17] : memref<16x128xf32, #tpu.memory_space<vmem>>, vector<1x32xf32>
    %c5 = arith.constant 5 : index
    %c0_18 = arith.constant 0 : index
    %39 = vector.load %arg3[%c5, %c0_18] : memref<16x128xf32, #tpu.memory_space<vmem>>, vector<1x32xf32>
    %cst_19 = arith.constant dense<0.000000e+00> : vector<16xf32>
    %40 = vector.multi_reduction <add>, %37, %cst_19 [1] : vector<16x32xf32> to vector<16xf32>
    %41 = vector.shape_cast %40 : vector<16xf32> to vector<16x1xf32>
    %cst_20 = arith.constant 3.200000e+01 : f32
    %42 = vector.broadcast %cst_20 : f32 to vector<16x1xf32>
    %43 = arith.divf %41, %42 : vector<16x1xf32>
    %44 = vector.broadcast %43 : vector<16x1xf32> to vector<16x32xf32>
    %45 = arith.subf %37, %44 : vector<16x32xf32>
    %46 = vector.broadcast %43 : vector<16x1xf32> to vector<16x32xf32>
    %47 = arith.subf %37, %46 : vector<16x32xf32>
    %48 = arith.mulf %45, %47 : vector<16x32xf32>
    %cst_21 = arith.constant dense<0.000000e+00> : vector<16xf32>
    %49 = vector.multi_reduction <add>, %48, %cst_21 [1] : vector<16x32xf32> to vector<16xf32>
    %50 = vector.shape_cast %49 : vector<16xf32> to vector<16x1xf32>
    %cst_22 = arith.constant 3.200000e+01 : f32
    %51 = vector.broadcast %cst_22 : f32 to vector<16x1xf32>
    %52 = arith.divf %50, %51 : vector<16x1xf32>
    %53 = vector.broadcast %43 : vector<16x1xf32> to vector<16x32xf32>
    %54 = arith.subf %37, %53 : vector<16x32xf32>
    %cst_23 = arith.constant 9.99999974E-6 : f32
    %55 = vector.broadcast %cst_23 : f32 to vector<16x1xf32>
    %56 = arith.addf %52, %55 : vector<16x1xf32>
    %57 = math.rsqrt %56 : vector<16x1xf32>
    %58 = vector.broadcast %57 : vector<16x1xf32> to vector<16x32xf32>
    %59 = arith.mulf %54, %58 : vector<16x32xf32>
    %60 = vector.broadcast %38 : vector<1x32xf32> to vector<16x32xf32>
    %61 = arith.mulf %59, %60 : vector<16x32xf32>
    %62 = vector.broadcast %39 : vector<1x32xf32> to vector<16x32xf32>
    %63 = arith.addf %61, %62 : vector<16x32xf32>
    %c0_24 = arith.constant 0 : index
    %c512 = arith.constant 512 : index
    %64 = vector.load %arg1[%c0_24, %c512] : memref<32x768xf32, #tpu.memory_space<vmem>>, vector<32x64xf32>
    %cst_25 = arith.constant dense<0.000000e+00> : vector<16x64xf32>
    %65 = tpu.matmul %63, %64, %cst_25 {dimension_numbers = #tpu.dot_dimension_numbers<[1], [0], [0], [1], [0, 0, 1, 1], [], []>} : vector<16x32xf32>, vector<32x64xf32>, vector<16x64xf32> -> vector<16x64xf32>
    %c6 = arith.constant 6 : index
    %c0_26 = arith.constant 0 : index
    %66 = vector.load %arg3[%c6, %c0_26] : memref<16x128xf32, #tpu.memory_space<vmem>>, vector<1x64xf32>
    %67 = vector.broadcast %66 : vector<1x64xf32> to vector<16x64xf32>
    %68 = arith.addf %65, %67 : vector<16x64xf32>
    %69 = arith.mulf %68, %68 : vector<16x64xf32>
    %70 = arith.mulf %68, %69 : vector<16x64xf32>
    %cst_27 = arith.constant 4.471500e-02 : f32
    %71 = vector.broadcast %cst_27 : f32 to vector<16x64xf32>
    %72 = arith.mulf %71, %70 : vector<16x64xf32>
    %73 = arith.addf %68, %72 : vector<16x64xf32>
    %cst_28 = arith.constant 0.797884583 : f32
    %74 = vector.broadcast %cst_28 : f32 to vector<16x64xf32>
    %75 = arith.mulf %74, %73 : vector<16x64xf32>
    %76 = math.tanh %75 : vector<16x64xf32>
    %cst_29 = arith.constant 1.000000e+00 : f32
    %77 = vector.broadcast %cst_29 : f32 to vector<16x64xf32>
    %78 = arith.addf %77, %76 : vector<16x64xf32>
    %cst_30 = arith.constant 5.000000e-01 : f32
    %79 = vector.broadcast %cst_30 : f32 to vector<16x64xf32>
    %80 = arith.mulf %79, %78 : vector<16x64xf32>
    %81 = arith.mulf %68, %80 : vector<16x64xf32>
    %c0_31 = arith.constant 0 : index
    %c0_32 = arith.constant 0 : index
    %82 = vector.load %arg2[%c0_31, %c0_32] : memref<64x32xf32, #tpu.memory_space<vmem>>, vector<64x32xf32>
    %cst_33 = arith.constant dense<0.000000e+00> : vector<16x32xf32>
    %83 = tpu.matmul %81, %82, %cst_33 {dimension_numbers = #tpu.dot_dimension_numbers<[1], [0], [0], [1], [0, 0, 1, 1], [], []>} : vector<16x64xf32>, vector<64x32xf32>, vector<16x32xf32> -> vector<16x32xf32>
    %c7 = arith.constant 7 : index
    %c0_34 = arith.constant 0 : index
    %84 = vector.load %arg3[%c7, %c0_34] : memref<16x128xf32, #tpu.memory_space<vmem>>, vector<1x32xf32>
    %85 = vector.broadcast %84 : vector<1x32xf32> to vector<16x32xf32>
    %86 = arith.addf %83, %85 : vector<16x32xf32>
    %87 = arith.addf %63, %86 : vector<16x32xf32>
    %c8 = arith.constant 8 : index
    %c0_35 = arith.constant 0 : index
    %88 = vector.load %arg3[%c8, %c0_35] : memref<16x128xf32, #tpu.memory_space<vmem>>, vector<1x32xf32>
    %c9 = arith.constant 9 : index
    %c0_36 = arith.constant 0 : index
    %89 = vector.load %arg3[%c9, %c0_36] : memref<16x128xf32, #tpu.memory_space<vmem>>, vector<1x32xf32>
    %cst_37 = arith.constant dense<0.000000e+00> : vector<16xf32>
    %90 = vector.multi_reduction <add>, %87, %cst_37 [1] : vector<16x32xf32> to vector<16xf32>
    %91 = vector.shape_cast %90 : vector<16xf32> to vector<16x1xf32>
    %cst_38 = arith.constant 3.200000e+01 : f32
    %92 = vector.broadcast %cst_38 : f32 to vector<16x1xf32>
    %93 = arith.divf %91, %92 : vector<16x1xf32>
    %94 = vector.broadcast %93 : vector<16x1xf32> to vector<16x32xf32>
    %95 = arith.subf %87, %94 : vector<16x32xf32>
    %96 = vector.broadcast %93 : vector<16x1xf32> to vector<16x32xf32>
    %97 = arith.subf %87, %96 : vector<16x32xf32>
    %98 = arith.mulf %95, %97 : vector<16x32xf32>
    %cst_39 = arith.constant dense<0.000000e+00> : vector<16xf32>
    %99 = vector.multi_reduction <add>, %98, %cst_39 [1] : vector<16x32xf32> to vector<16xf32>
    %100 = vector.shape_cast %99 : vector<16xf32> to vector<16x1xf32>
    %cst_40 = arith.constant 3.200000e+01 : f32
    %101 = vector.broadcast %cst_40 : f32 to vector<16x1xf32>
    %102 = arith.divf %100, %101 : vector<16x1xf32>
    %103 = vector.broadcast %93 : vector<16x1xf32> to vector<16x32xf32>
    %104 = arith.subf %87, %103 : vector<16x32xf32>
    %cst_41 = arith.constant 9.99999974E-6 : f32
    %105 = vector.broadcast %cst_41 : f32 to vector<16x1xf32>
    %106 = arith.addf %102, %105 : vector<16x1xf32>
    %107 = math.rsqrt %106 : vector<16x1xf32>
    %108 = vector.broadcast %107 : vector<16x1xf32> to vector<16x32xf32>
    %109 = arith.mulf %104, %108 : vector<16x32xf32>
    %110 = vector.broadcast %88 : vector<1x32xf32> to vector<16x32xf32>
    %111 = arith.mulf %109, %110 : vector<16x32xf32>
    %112 = vector.broadcast %89 : vector<1x32xf32> to vector<16x32xf32>
    %113 = arith.addf %111, %112 : vector<16x32xf32>
    %c13 = arith.constant 13 : index
    %c0_42 = arith.constant 0 : index
    %114 = vector.load %arg3[%c13, %c0_42] : memref<16x128xf32, #tpu.memory_space<vmem>>, vector<2x16xf32>
    %cst_43 = arith.constant dense<0.000000e+00> : vector<2x32xf32>
    %115 = tpu.matmul %114, %113, %cst_43 {dimension_numbers = #tpu.dot_dimension_numbers<[1], [0], [0], [1], [0, 0, 1, 1], [], []>} : vector<2x16xf32>, vector<16x32xf32>, vector<2x32xf32> -> vector<2x32xf32>
    %c0_44 = arith.constant 0 : index
    %c640 = arith.constant 640 : index
    %116 = vector.load %arg1[%c0_44, %c640] : memref<32x768xf32, #tpu.memory_space<vmem>>, vector<32x128xf32>
    %cst_45 = arith.constant dense<0.000000e+00> : vector<2x128xf32>
    %117 = tpu.matmul %115, %116, %cst_45 {dimension_numbers = #tpu.dot_dimension_numbers<[1], [0], [0], [1], [0, 0, 1, 1], [], []>} : vector<2x32xf32>, vector<32x128xf32>, vector<2x128xf32> -> vector<2x128xf32>
    %c10 = arith.constant 10 : index
    %c0_46 = arith.constant 0 : index
    %118 = vector.load %arg3[%c10, %c0_46] : memref<16x128xf32, #tpu.memory_space<vmem>>, vector<1x128xf32>
    %119 = vector.broadcast %118 : vector<1x128xf32> to vector<2x128xf32>
    %120 = arith.addf %117, %119 : vector<2x128xf32>
    %c11 = arith.constant 11 : index
    %c0_47 = arith.constant 0 : index
    %121 = vector.load %arg3[%c11, %c0_47] : memref<16x128xf32, #tpu.memory_space<vmem>>, vector<1x128xf32>
    %122 = vector.broadcast %121 : vector<1x128xf32> to vector<2x128xf32>
    %123 = arith.mulf %120, %122 : vector<2x128xf32>
    %cst_48 = arith.constant dense<0.000000e+00> : vector<2xf32>
    %124 = vector.multi_reduction <add>, %123, %cst_48 [1] : vector<2x128xf32> to vector<2xf32>
    %125 = vector.shape_cast %124 : vector<2xf32> to vector<2x1xf32>
    %c12 = arith.constant 12 : index
    %c0_49 = arith.constant 0 : index
    %126 = vector.load %arg3[%c12, %c0_49] : memref<16x128xf32, #tpu.memory_space<vmem>>, vector<1x1xf32>
    %127 = vector.broadcast %126 : vector<1x1xf32> to vector<2x1xf32>
    %128 = arith.addf %125, %127 : vector<2x1xf32>
    %c0_50 = arith.constant 0 : index
    %c16 = arith.constant 16 : index
    %129 = vector.load %arg4[%c0_50, %c16] : memref<16x17xf32, #tpu.memory_space<vmem>>, vector<2x1xf32>
    %130 = arith.subf %128, %129 : vector<2x1xf32>
    %131 = arith.mulf %130, %130 : vector<2x1xf32>
    %132 = vector.shape_cast %131 : vector<2x1xf32> to vector<1x2x1xf32>
    %cst_51 = arith.constant dense<0.000000e+00> : vector<1xf32>
    %133 = vector.multi_reduction <add>, %132, %cst_51 [1, 2] : vector<1x2x1xf32> to vector<1xf32>
    %134 = vector.shape_cast %133 : vector<1xf32> to vector<1x1x1xf32>
    %135 = vector.extract %134[0, 0, 0] : f32 from vector<1x1x1xf32>
    %136 = vector.broadcast %135 : f32 to vector<1x1xf32>
    %cst_52 = arith.constant 5.000000e-01 : f32
    %137 = vector.broadcast %cst_52 : f32 to vector<1x1xf32>
    %138 = arith.mulf %136, %137 : vector<1x1xf32>
    %c0_53 = arith.constant 0 : index
    %c0_54 = arith.constant 0 : index
    %139 = vector.load %arg5[%c0_53, %c0_54] : memref<8x128xf32, #tpu.memory_space<vmem>>, vector<2x128xf32>
    tpu.vector_store %arg5[%c0_53, %c0_54], %120 {strides = array<i32>} : memref<8x128xf32, #tpu.memory_space<vmem>>, vector<2x128xf32>,
    %140 = vector.shape_cast %128 : vector<2x1xf32> to vector<2x1xf32>
    %141 = vector.broadcast %140 : vector<2x1xf32> to vector<2x128xf32>
    %c2_55 = arith.constant 2 : index
    %c0_56 = arith.constant 0 : index
    %142 = vector.load %arg5[%c2_55, %c0_56] : memref<8x128xf32, #tpu.memory_space<vmem>>, vector<2x128xf32>
    tpu.vector_store %arg5[%c2_55, %c0_56], %141 {strides = array<i32>} : memref<8x128xf32, #tpu.memory_space<vmem>>, vector<2x128xf32>,
    %143 = vector.shape_cast %138 : vector<1x1xf32> to vector<1x1xf32>
    %144 = vector.broadcast %143 : vector<1x1xf32> to vector<4x128xf32>
    %c4_57 = arith.constant 4 : index
    %c0_58 = arith.constant 0 : index
    %145 = vector.load %arg5[%c4_57, %c0_58] : memref<8x128xf32, #tpu.memory_space<vmem>>, vector<4x128xf32>
    tpu.vector_store %arg5[%c4_57, %c0_58], %144 {strides = array<i32>} : memref<8x128xf32, #tpu.memory_space<vmem>>, vector<4x128xf32>,
    return
  }
}

</mosaic_0001>

<llo_original>
// kernel: tpu_custom_call.1
$region0: #{tpu_custom_call.1}
  #allocation0 [shape = 'u32[]', space=smem, size = 0x4, offset = 0x4, fixed_abs, tag = 'smem constant byte address 0x4 - core index']
  #allocation1 [shape = 'u32[144,128]{1,0:T(1,128)}', space=vmem, size = 0x12000, scoped, tag = 'internal scratch']
  %s0 = inlined_call_operand.vmem [shape: f32[16,32], index: 0, kind: input, shape index: {}]
  %s1 = inlined_call_operand.hbm [shape: f32[32,768], index: 1, kind: input, shape index: {}]
  %s2 = inlined_call_operand.vmem [shape: f32[64,32], index: 2, kind: input, shape index: {}]
  %s3 = inlined_call_operand.vmem [shape: f32[16,128], index: 3, kind: input, shape index: {}]
  %s4 = inlined_call_operand.vmem [shape: f32[16,17], index: 4, kind: input, shape index: {}]
  %s5 = inlined_call_operand.hbm [shape: f32[8,128], index: 5, kind: output, shape index: {}]
  %s6 = sld [smem:[#allocation0]]
  $region34: #{tpu_custom_call.1} parent=0
    _
  %s8 = ssub.s32 1, %s6
  %s9 = scalar_select 0, %s8, %s6
  $region1: #{tpu_custom_call.1} parent=0
    #allocation2 [shape = 'u8[98304]{0}', space=vmem, size = 0x18000, scoped, tag = 'input window, operand 1, single buffered']
    #allocation3 [shape = 's32[1]{0}', space=sflag, size = 0x4, scoped, tag = 'scoped memory for tpu_custom_call.1']
    #allocation4 [shape = 's32[1]{0}', space=sflag, size = 0x4, scoped, tag = 'scoped memory for tpu_custom_call.1']
    #allocation5 [shape = 'u8[4096]{0}', space=vmem, size = 0x1000, scoped, tag = 'output window, operand 0, single buffered']
    %10 = vsyncpa [#allocation3], 0
    %11 = vsyncpa [#allocation4], 0
    // Predicated region
    $region2: #{tpu_custom_call.1} parent=1 // pred_check
      _
    $region3: #{tpu_custom_call.1} parent=1 // pred_check_branch
      %13 = sbr.rel (0) target = $region5
    $region4: #{tpu_custom_call.1} parent=1 // pred_region
      _
    $region5: #{tpu_custom_call.1} parent=1 // pred_fallthru
      _
    // Predicated region
    $region6: #{tpu_custom_call.1} parent=1 // pred_check
      _
    $region7: #{tpu_custom_call.1} parent=1 // pred_check_branch
      %15 = sbr.rel (0) target = $region9
    $region8: #{tpu_custom_call.1} parent=1 // pred_region
      %s17 = ssub.s32 3072, 3072
      %18 = vsyncadd [#allocation3], %s17
      %s19 = sshll.u32 [#allocation2], 4
      %s20 = int_to_ptr.vmem [resolvable:$true] %s19
      %25 = dma.hbm_to_vmem [thread:$0]  %s1, 3072, %s20, [#allocation3], 768, 768, 48
    $region9: #{tpu_custom_call.1} parent=1 // pred_fallthru
      _
    // Predicated region
    $region10: #{tpu_custom_call.1} parent=1 // pred_check
      _
    $region11: #{tpu_custom_call.1} parent=1 // pred_check_branch
      %27 = sbr.rel (0) target = $region13
    $region12: #{tpu_custom_call.1} parent=1 // pred_region
      _
    $region13: #{tpu_custom_call.1} parent=1 // pred_fallthru
      _
    // Predicated region
    $region14: #{tpu_custom_call.1} parent=1 // pred_check
      _
    $region15: #{tpu_custom_call.1} parent=1 // pred_check_branch
      %29 = sbr.rel (0) target = $region17
    $region16: #{tpu_custom_call.1} parent=1 // pred_region
      _
    $region17: #{tpu_custom_call.1} parent=1 // pred_fallthru
      _
    // Predicated region
    $region18: #{tpu_custom_call.1} parent=1 // pred_check
      _
    $region19: #{tpu_custom_call.1} parent=1 // pred_check_branch
      %31 = sbr.rel (0) target = $region21
    $region20: #{tpu_custom_call.1} parent=1 // pred_region
      _
    $region21: #{tpu_custom_call.1} parent=1 // pred_fallthru
      _
    // Predicated region
    $region22: #{tpu_custom_call.1} parent=1 // pred_check
      _
    $region23: #{tpu_custom_call.1} parent=1 // pred_check_branch
      %33 = sbr.rel (0) target = $region25
    $region24: #{tpu_custom_call.1} parent=1 // pred_region
      %34 = dma.done [#allocation3], 3072
    $region25: #{tpu_custom_call.1} parent=1 // pred_fallthru
      _
    %v35 = vld [vmem:[%s0] sm:$0xff]
    %v36 = vld [vmem:[%s0 + $0x8] sm:$0xff]
    %v37 = vld [vmem:[#allocation2] sm:$0xff]
    %v38 = vld [vmem:[#allocation2 + $0x8] sm:$0xff]
    %v39 = vld [vmem:[#allocation2 + $0x10] sm:$0xff]
    %v40 = vld [vmem:[#allocation2 + $0x30] sm:$0xff]
    %v41 = vld [vmem:[#allocation2 + $0x38] sm:$0xff]
    %v42 = vld [vmem:[#allocation2 + $0x40] sm:$0xff]
    %v43 = vld [vmem:[#allocation2 + $0x60] sm:$0xff]
    %v44 = vld [vmem:[#allocation2 + $0x68] sm:$0xff]
    %v45 = vld [vmem:[#allocation2 + $0x70] sm:$0xff]
    %v46 = vld [vmem:[#allocation2 + $0x90] sm:$0xff]
    %v47 = vld [vmem:[#allocation2 + $0x98] sm:$0xff]
    %v48 = vld [vmem:[#allocation2 + $0xa0] sm:$0xff]
    %vm49 = vcmask 261120
    %v51 = vsel %vm49, %v35, 0
    %v54 = vsel %vm49, %v36, 0
    %56 = vmatprep.subr.mxu0 0.0
    %57 = vmatpush1.msra.mxu0 0.0
    %58 = vmatprep.subr.mxu0 0.0
    %59 = vmatpush1.msra.mxu0 0.0
    %60 = vmatprep.subr.mxu0 0.0
    %61 = vmatpush1.msra.mxu0 0.0
    %62 = vmatprep.subr.mxu0 0.0
    %63 = vmatpush1.msra.mxu0 0.0
    %64 = vmatprep.subr.mxu0 0.0
    %65 = vmatpush1.msra.mxu0 0.0
    %66 = vmatprep.subr.mxu0 0.0
    %67 = vmatpush1.msra.mxu0 0.0
    %68 = vmatprep.subr.mxu0 0.0
    %69 = vmatpush1.msra.mxu0 0.0
    %70 = vmatprep.subr.mxu0 0.0
    %71 = vmatpush1.msra.mxu0 0.0
    %72 = vmatprep.subr.mxu0 0.0
    %73 = vmatpush1.msra.mxu0 0.0
    %74 = vmatprep.subr.mxu0 0.0
    %75 = vmatpush1.msra.mxu0 0.0
    %76 = vmatprep.subr.mxu0 0.0
    %77 = vmatpush1.msra.mxu0 0.0
    %78 = vmatprep.subr.mxu0 0.0
    %79 = vmatpush1.msra.mxu0 0.0
    %80 = vmatprep.subr.mxu0 %v47
    %81 = vmatpush1.msra.mxu0 %v46
    %82 = vmatprep.subr.mxu0 %v44
    %83 = vmatpush1.msra.mxu0 %v43
    %84 = vmatprep.subr.mxu0 %v41
    %85 = vmatpush1.msra.mxu0 %v40
    %86 = vmatprep.subr.mxu0 %v38
    %87 = vmatpush1.msra.mxu0 %v37
    %88 = vmatprep.subr.mxu0 0.0
    %89 = vmatpush2.msra.mxu0 0.0
    %90 = vmatprep.subr.mxu0 0.0
    %91 = vmatpush2.msra.mxu0 0.0
    %92 = vmatprep.subr.mxu0 0.0
    %93 = vmatpush2.msra.mxu0 0.0
    %94 = vmatprep.subr.mxu0 0.0
    %95 = vmatpush2.msra.mxu0 0.0
    %96 = vmatprep.subr.mxu0 0.0
    %97 = vmatpush2.msra.mxu0 0.0
    %98 = vmatprep.subr.mxu0 0.0
    %99 = vmatpush2.msra.mxu0 0.0
    %100 = vmatprep.subr.mxu0 0.0
    %101 = vmatpush2.msra.mxu0 0.0
    %102 = vmatprep.subr.mxu0 0.0
    %103 = vmatpush2.msra.mxu0 0.0
    %104 = vmatprep.subr.mxu0 0.0
    %105 = vmatpush2.msra.mxu0 0.0
    %106 = vmatprep.subr.mxu0 0.0
    %107 = vmatpush2.msra.mxu0 0.0
    %108 = vmatprep.subr.mxu0 0.0
    %109 = vmatpush2.msra.mxu0 0.0
    %110 = vmatprep.subr.mxu0 0.0
    %111 = vmatpush2.msra.mxu0 0.0
    %112 = vmatprep.subr.mxu0 0.0
    %113 = vmatpush2.msra.mxu0 0.0
    %114 = vmatprep.subr.mxu0 0.0
    %115 = vmatpush2.msra.mxu0 0.0
    %116 = vmatprep.subr.mxu0 0.0
    %117 = vmatpush2.msra.mxu0 0.0
    %118 = vmatprep.subr.mxu0 0.0
    %119 = vmatpush2.msra.mxu0 0.0
    %120 = vmatprep.mubr.f32.mxu0 0.0
    %121 = vmatmul.mubr.f32.gmra.mxu0 %v51
    %v122 = vpop.f32.mrf.mxu0
    %v123 = vadd.f32 0.0, %v122
    %v124 = vpop.f32.mrf.mxu0
    %v125 = vadd.f32 0.0, %v124
    %126 = vmatprep.mubr.f32.mxu0 0.0
    %127 = vmatmul.mubr.f32.gmra.mxu0 %v54
    %v128 = vpop.f32.mrf.mxu0
    %v129 = vadd.f32 0.0, %v128
    %v130 = vpop.f32.mrf.mxu0
    %v131 = vadd.f32 0.0, %v130
    %132 = vdwg.mxu0
    %133 = vmatprep.subr.mxu0 0.0
    %134 = vmatpush1.msra.mxu0 0.0
    %135 = vmatprep.subr.mxu0 0.0
    %136 = vmatpush1.msra.mxu0 0.0
    %137 = vmatprep.subr.mxu0 0.0
    %138 = vmatpush1.msra.mxu0 0.0
    %139 = vmatprep.subr.mxu0 0.0
    %140 = vmatpush1.msra.mxu0 0.0
    %141 = vmatprep.subr.mxu0 0.0
    %142 = vmatpush1.msra.mxu0 0.0
    %143 = vmatprep.subr.mxu0 0.0
    %144 = vmatpush1.msra.mxu0 0.0
    %145 = vmatprep.subr.mxu0 0.0
    %146 = vmatpush1.msra.mxu0 0.0
    %147 = vmatprep.subr.mxu0 0.0
    %148 = vmatpush1.msra.mxu0 0.0
    %149 = vmatprep.subr.mxu0 0.0
    %150 = vmatpush1.msra.mxu0 0.0
    %151 = vmatprep.subr.mxu0 0.0
    %152 = vmatpush1.msra.mxu0 0.0
    %153 = vmatprep.subr.mxu0 0.0
    %154 = vmatpush1.msra.mxu0 0.0
    %155 = vmatprep.subr.mxu0 0.0
    %156 = vmatpush1.msra.mxu0 0.0
    %157 = vmatprep.subr.mxu0 0.0
    %158 = vmatpush1.msra.mxu0 %v48
    %159 = vmatprep.subr.mxu0 0.0
    %160 = vmatpush1.msra.mxu0 %v45
    %161 = vmatprep.subr.mxu0 0.0
    %162 = vmatpush1.msra.mxu0 %v42
    %163 = vmatprep.subr.mxu0 0.0
    %164 = vmatpush1.msra.mxu0 %v39
    %165 = vmatprep.subr.mxu0 0.0
    %166 = vmatpush2.msra.mxu0 0.0
    %167 = vmatprep.subr.mxu0 0.0
    %168 = vmatpush2.msra.mxu0 0.0
    %169 = vmatprep.subr.mxu0 0.0
    %170 = vmatpush2.msra.mxu0 0.0
    %171 = vmatprep.subr.mxu0 0.0
    %172 = vmatpush2.msra.mxu0 0.0
    %173 = vmatprep.subr.mxu0 0.0
    %174 = vmatpush2.msra.mxu0 0.0
    %175 = vmatprep.subr.mxu0 0.0
    %176 = vmatpush2.msra.mxu0 0.0
    %177 = vmatprep.subr.mxu0 0.0
    %178 = vmatpush2.msra.mxu0 0.0
    %179 = vmatprep.subr.mxu0 0.0
    %180 = vmatpush2.msra.mxu0 0.0
    %181 = vmatprep.subr.mxu0 0.0
    %182 = vmatpush2.msra.mxu0 0.0
    %183 = vmatprep.subr.mxu0 0.0
    %184 = vmatpush2.msra.mxu0 0.0
    %185 = vmatprep.subr.mxu0 0.0
    %186 = vmatpush2.msra.mxu0 0.0
    %187 = vmatprep.subr.mxu0 0.0
    %188 = vmatpush2.msra.mxu0 0.0
    %189 = vmatprep.subr.mxu0 0.0
    %190 = vmatpush2.msra.mxu0 0.0
    %191 = vmatprep.subr.mxu0 0.0
    %192 = vmatpush2.msra.mxu0 0.0
    %193 = vmatprep.subr.mxu0 0.0
    %194 = vmatpush2.msra.mxu0 0.0
    %195 = vmatprep.subr.mxu0 0.0
    %196 = vmatpush2.msra.mxu0 0.0
    %197 = vmatprep.mubr.f32.mxu0 0.0
    %198 = vmatmul.mubr.f32.gmra.mxu0 %v51
    %v199 = vpop.f32.mrf.mxu0
    %v200 = vadd.f32 0.0, %v199
    %v201 = vpop.f32.mrf.mxu0
    %202 = vmatprep.mubr.f32.mxu0 0.0
    %203 = vmatmul.mubr.f32.gmra.mxu0 %v54
    %v204 = vpop.f32.mrf.mxu0
    %v205 = vadd.f32 0.0, %v204
    %v206 = vpop.f32.mrf.mxu0
    %207 = vdwg.mxu0
    %v208 = vld [vmem:[%s3] sm:$0x1]
    %v209 = vlaneseq
    %v210 = vshrl.u32 %v209, 7
    %v211 = vsub.s32 0, %v210
    %v212 = vrot.slane %v208, %v211
    %v213 = vadd.f32 %v123, %v212
    %v214 = vadd.f32 %v129, %v212
    %v215 = vld [vmem:[%s3 + $0x1] sm:$0x1]
    %v216 = vlaneseq
    %v217 = vshrl.u32 %v216, 7
    %v218 = vsub.s32 0, %v217
    %v219 = vrot.slane %v215, %v218
    %v220 = vadd.f32 %v125, %v219
    %v221 = vadd.f32 %v131, %v219
    %v222 = vld [vmem:[%s3 + $0x2] sm:$0x1]
    %v223 = vlaneseq
    %v224 = vshrl.u32 %v223, 7
    %v225 = vsub.s32 0, %v224
    %v226 = vrot.slane %v222, %v225
    %v227 = vadd.f32 %v200, %v226
    %v228 = vadd.f32 %v205, %v226
    %v230 = vsel %vm49, %v213, 0
    %v233 = vsel %vm49, %v214, 0
    %v236 = vsel %vm49, %v220, 0
    %v239 = vsel %vm49, %v221, 0
    %241 = vmatprep.subr.mxu0 0.0
    %242 = vmatpush1.xpose.msra.mxu0 0.0
    %243 = vmatprep.subr.mxu0 0.0
    %244 = vmatpush1.xpose.msra.mxu0 0.0
    %245 = vmatprep.subr.mxu0 0.0
    %246 = vmatpush1.xpose.msra.mxu0 0.0
    %247 = vmatprep.subr.mxu0 0.0
    %248 = vmatpush1.xpose.msra.mxu0 0.0
    %249 = vmatprep.subr.mxu0 0.0
    %250 = vmatpush1.xpose.msra.mxu0 0.0
    %251 = vmatprep.subr.mxu0 0.0
    %252 = vmatpush1.xpose.msra.mxu0 0.0
    %253 = vmatprep.subr.mxu0 0.0
    %254 = vmatpush1.xpose.msra.mxu0 0.0
    %255 = vmatprep.subr.mxu0 0.0
    %256 = vmatpush1.xpose.msra.mxu0 0.0
    %257 = vmatprep.subr.mxu0 0.0
    %258 = vmatpush1.xpose.msra.mxu0 0.0
    %259 = vmatprep.subr.mxu0 0.0
    %260 = vmatpush1.xpose.msra.mxu0 0.0
    %261 = vmatprep.subr.mxu0 0.0
    %262 = vmatpush1.xpose.msra.mxu0 0.0
    %263 = vmatprep.subr.mxu0 0.0
    %264 = vmatpush1.xpose.msra.mxu0 0.0
    %265 = vmatprep.subr.mxu0 0.0
    %266 = vmatpush1.xpose.msra.mxu0 0.0
    %267 = vmatprep.subr.mxu0 0.0
    %268 = vmatpush1.xpose.msra.mxu0 0.0
    %269 = vmatprep.subr.mxu0 0.0
    %270 = vmatpush1.xpose.msra.mxu0 %v239
    %271 = vmatprep.subr.mxu0 0.0
    %272 = vmatpush1.xpose.msra.mxu0 %v236
    %273 = vmatprep.subr.mxu0 0.0
    %274 = vmatpush2.xpose.msra.mxu0 0.0
    %275 = vmatprep.subr.mxu0 0.0
    %276 = vmatpush2.xpose.msra.mxu0 0.0
    %277 = vmatprep.subr.mxu0 0.0
    %278 = vmatpush2.xpose.msra.mxu0 0.0
    %279 = vmatprep.subr.mxu0 0.0
    %280 = vmatpush2.xpose.msra.mxu0 0.0
    %281 = vmatprep.subr.mxu0 0.0
    %282 = vmatpush2.xpose.msra.mxu0 0.0
    %283 = vmatprep.subr.mxu0 0.0
    %284 = vmatpush2.xpose.msra.mxu0 0.0
    %285 = vmatprep.subr.mxu0 0.0
    %286 = vmatpush2.xpose.msra.mxu0 0.0
    %287 = vmatprep.subr.mxu0 0.0
    %288 = vmatpush2.xpose.msra.mxu0 0.0
    %289 = vmatprep.subr.mxu0 0.0
    %290 = vmatpush2.xpose.msra.mxu0 0.0
    %291 = vmatprep.subr.mxu0 0.0
    %292 = vmatpush2.xpose.msra.mxu0 0.0
    %293 = vmatprep.subr.mxu0 0.0
    %294 = vmatpush2.xpose.msra.mxu0 0.0
    %295 = vmatprep.subr.mxu0 0.0
    %296 = vmatpush2.xpose.msra.mxu0 0.0
    %297 = vmatprep.subr.mxu0 0.0
    %298 = vmatpush2.xpose.msra.mxu0 0.0
    %299 = vmatprep.subr.mxu0 0.0
    %300 = vmatpush2.xpose.msra.mxu0 0.0
    %301 = vmatprep.subr.mxu0 0.0
    %302 = vmatpush2.xpose.msra.mxu0 0.0
    %303 = vmatprep.subr.mxu0 0.0
    %304 = vmatpush2.xpose.msra.mxu0 0.0
    %305 = vmatprep.mubr.f32.mxu0 0.0
    %306 = vmatmul.mubr.f32.gmra.mxu0 %v230
    %v307 = vpop.f32.mrf.mxu0
    %v308 = vadd.f32 0.0, %v307
    %v309 = vpop.f32.mrf.mxu0
    %310 = vmatprep.mubr.f32.mxu0 0.0
    %311 = vmatmul.mubr.f32.gmra.mxu0 %v233
    %v312 = vpop.f32.mrf.mxu0
    %v313 = vadd.f32 0.0, %v312
    %v314 = vpop.f32.mrf.mxu0
    %315 = vdwg.mxu0
    %v316 = vmul.f32 %v308, 0.17677669
    %v317 = vmul.f32 %v313, 0.17677669
    %v318 = vld [vmem:[%s4] sm:$0xff]
    %v319 = vld [vmem:[%s4 + $0x8] sm:$0xff]
    %v320 = vadd.f32 %v316, %v318
    %v321 = vadd.f32 %v317, %v319
    %vm322 = vcmask 130048
    %v323 = vsel %vm322, %v320, -inf
    %324 = vmax.xlane.f32.xlu0 %v323
    %v325 = vpop.xlane.xlu0 %324
    %v326 = vsel %vm322, %v321, -inf
    %327 = vmax.xlane.f32.xlu0 %v326
    %v328 = vpop.xlane.xlu0 %327
    %v329 = vsub.f32 %v320, %v325
    %v330 = vsub.f32 %v321, %v328
    %v331 = vmul.f32 %v329, 1.442695
    %v332 = vpow.pop %v331
    %v333 = vmul.f32 %v330, 1.442695
    %v334 = vpow.pop %v333
    %v335 = vsel %vm322, %v332, 0.0
    %336 = vadd.xlane.f32.xlu0 %v335
    %v337 = vpop.xlane.xlu0 %336
    %v338 = vsel %vm322, %v334, 0.0
    %339 = vadd.xlane.f32.xlu0 %v338
    %v340 = vpop.xlane.xlu0 %339
    %v341 = vrcp.pop %v337
    %v342 = vrcp.pop %v340
    %v343 = vmul.f32 %v332, %v341
    %v344 = vmul.f32 %v334, %v342
    %v346 = vsel %vm322, %v343, 0
    %v349 = vsel %vm322, %v344, 0
    %351 = vmatprep.subr.mxu0 0.0
    %352 = vmatpush1.msra.mxu0 0.0
    %353 = vmatprep.subr.mxu0 0.0
    %354 = vmatpush1.msra.mxu0 0.0
    %355 = vmatprep.subr.mxu0 0.0
    %356 = vmatpush1.msra.mxu0 0.0
    %357 = vmatprep.subr.mxu0 0.0
    %358 = vmatpush1.msra.mxu0 0.0
    %359 = vmatprep.subr.mxu0 0.0
    %360 = vmatpush1.msra.mxu0 0.0
    %361 = vmatprep.subr.mxu0 0.0
    %362 = vmatpush1.msra.mxu0 0.0
    %363 = vmatprep.subr.mxu0 0.0
    %364 = vmatpush1.msra.mxu0 0.0
    %365 = vmatprep.subr.mxu0 0.0
    %366 = vmatpush1.msra.mxu0 0.0
    %367 = vmatprep.subr.mxu0 0.0
    %368 = vmatpush1.msra.mxu0 0.0
    %369 = vmatprep.subr.mxu0 0.0
    %370 = vmatpush1.msra.mxu0 0.0
    %371 = vmatprep.subr.mxu0 0.0
    %372 = vmatpush1.msra.mxu0 0.0
    %373 = vmatprep.subr.mxu0 0.0
    %374 = vmatpush1.msra.mxu0 0.0
    %375 = vmatprep.subr.mxu0 0.0
    %376 = vmatpush1.msra.mxu0 0.0
    %377 = vmatprep.subr.mxu0 0.0
    %378 = vmatpush1.msra.mxu0 0.0
    %379 = vmatprep.subr.mxu0 0.0
    %380 = vmatpush1.msra.mxu0 %v228
    %381 = vmatprep.subr.mxu0 0.0
    %382 = vmatpush1.msra.mxu0 %v227
    %383 = vmatprep.subr.mxu0 0.0
    %384 = vmatpush2.msra.mxu0 0.0
    %385 = vmatprep.subr.mxu0 0.0
    %386 = vmatpush2.msra.mxu0 0.0
    %387 = vmatprep.subr.mxu0 0.0
    %388 = vmatpush2.msra.mxu0 0.0
    %389 = vmatprep.subr.mxu0 0.0
    %390 = vmatpush2.msra.mxu0 0.0
    %391 = vmatprep.subr.mxu0 0.0
    %392 = vmatpush2.msra.mxu0 0.0
    %393 = vmatprep.subr.mxu0 0.0
    %394 = vmatpush2.msra.mxu0 0.0
    %395 = vmatprep.subr.mxu0 0.0
    %396 = vmatpush2.msra.mxu0 0.0
    %397 = vmatprep.subr.mxu0 0.0
    %398 = vmatpush2.msra.mxu0 0.0
    %399 = vmatprep.subr.mxu0 0.0
    %400 = vmatpush2.msra.mxu0 0.0
    %401 = vmatprep.subr.mxu0 0.0
    %402 = vmatpush2.msra.mxu0 0.0
    %403 = vmatprep.subr.mxu0 0.0
    %404 = vmatpush2.msra.mxu0 0.0
    %405 = vmatprep.subr.mxu0 0.0
    %406 = vmatpush2.msra.mxu0 0.0
    %407 = vmatprep.subr.mxu0 0.0
    %408 = vmatpush2.msra.mxu0 0.0
    %409 = vmatprep.subr.mxu0 0.0
    %410 = vmatpush2.msra.mxu0 0.0
    %411 = vmatprep.subr.mxu0 0.0
    %412 = vmatpush2.msra.mxu0 0.0
    %413 = vmatprep.subr.mxu0 0.0
    %414 = vmatpush2.msra.mxu0 0.0
    %415 = vmatprep.mubr.f32.mxu0 0.0
    %416 = vmatmul.mubr.f32.gmra.mxu0 %v346
    %v417 = vpop.f32.mrf.mxu0
    %v418 = vadd.f32 0.0, %v417
    %v419 = vpop.f32.mrf.mxu0
    %420 = vmatprep.mubr.f32.mxu0 0.0
    %421 = vmatmul.mubr.f32.gmra.mxu0 %v349
    %v422 = vpop.f32.mrf.mxu0
    %v423 = vadd.f32 0.0, %v422
    %v424 = vpop.f32.mrf.mxu0
    %425 = vdwg.mxu0
    %v426 = vld [vmem:[#allocation2 + $0x18] sm:$0xff]
    %v427 = vld [vmem:[#allocation2 + $0x48] sm:$0xff]
    %v428 = vld [vmem:[#allocation2 + $0x78] sm:$0xff]
    %v429 = vld [vmem:[#allocation2 + $0xa8] sm:$0xff]
    %v430 = vld [vmem:[%s3 + $0x3] sm:$0x1]
    %v431 = vlaneseq
    %v432 = vshrl.u32 %v431, 7
    %v433 = vsub.s32 0, %v432
    %v434 = vrot.slane %v430, %v433
    %v436 = vsel %vm49, %v418, 0
    %v439 = vsel %vm49, %v423, 0
    %441 = vmatprep.subr.mxu0 0.0
    %442 = vmatpush1.msra.mxu0 0.0
    %443 = vmatprep.subr.mxu0 0.0
    %444 = vmatpush1.msra.mxu0 0.0
    %445 = vmatprep.subr.mxu0 0.0
    %446 = vmatpush1.msra.mxu0 0.0
    %447 = vmatprep.subr.mxu0 0.0
    %448 = vmatpush1.msra.mxu0 0.0
    %449 = vmatprep.subr.mxu0 0.0
    %450 = vmatpush1.msra.mxu0 0.0
    %451 = vmatprep.subr.mxu0 0.0
    %452 = vmatpush1.msra.mxu0 0.0
    %453 = vmatprep.subr.mxu0 0.0
    %454 = vmatpush1.msra.mxu0 0.0
    %455 = vmatprep.subr.mxu0 0.0
    %456 = vmatpush1.msra.mxu0 0.0
    %457 = vmatprep.subr.mxu0 0.0
    %458 = vmatpush1.msra.mxu0 0.0
    %459 = vmatprep.subr.mxu0 0.0
    %460 = vmatpush1.msra.mxu0 0.0
    %461 = vmatprep.subr.mxu0 0.0
    %462 = vmatpush1.msra.mxu0 0.0
    %463 = vmatprep.subr.mxu0 0.0
    %464 = vmatpush1.msra.mxu0 0.0
    %465 = vmatprep.subr.mxu0 0.0
    %466 = vmatpush1.msra.mxu0 %v429
    %467 = vmatprep.subr.mxu0 0.0
    %468 = vmatpush1.msra.mxu0 %v428
    %469 = vmatprep.subr.mxu0 0.0
    %470 = vmatpush1.msra.mxu0 %v427
    %471 = vmatprep.subr.mxu0 0.0
    %472 = vmatpush1.msra.mxu0 %v426
    %473 = vmatprep.subr.mxu0 0.0
    %474 = vmatpush2.msra.mxu0 0.0
    %475 = vmatprep.subr.mxu0 0.0
    %476 = vmatpush2.msra.mxu0 0.0
    %477 = vmatprep.subr.mxu0 0.0
    %478 = vmatpush2.msra.mxu0 0.0
    %479 = vmatprep.subr.mxu0 0.0
    %480 = vmatpush2.msra.mxu0 0.0
    %481 = vmatprep.subr.mxu0 0.0
    %482 = vmatpush2.msra.mxu0 0.0
    %483 = vmatprep.subr.mxu0 0.0
    %484 = vmatpush2.msra.mxu0 0.0
    %485 = vmatprep.subr.mxu0 0.0
    %486 = vmatpush2.msra.mxu0 0.0
    %487 = vmatprep.subr.mxu0 0.0
    %488 = vmatpush2.msra.mxu0 0.0
    %489 = vmatprep.subr.mxu0 0.0
    %490 = vmatpush2.msra.mxu0 0.0
    %491 = vmatprep.subr.mxu0 0.0
    %492 = vmatpush2.msra.mxu0 0.0
    %493 = vmatprep.subr.mxu0 0.0
    %494 = vmatpush2.msra.mxu0 0.0
    %495 = vmatprep.subr.mxu0 0.0
    %496 = vmatpush2.msra.mxu0 0.0
    %497 = vmatprep.subr.mxu0 0.0
    %498 = vmatpush2.msra.mxu0 0.0
    %499 = vmatprep.subr.mxu0 0.0
    %500 = vmatpush2.msra.mxu0 0.0
    %501 = vmatprep.subr.mxu0 0.0
    %502 = vmatpush2.msra.mxu0 0.0
    %503 = vmatprep.subr.mxu0 0.0
    %504 = vmatpush2.msra.mxu0 0.0
    %505 = vmatprep.mubr.f32.mxu0 0.0
    %506 = vmatmul.mubr.f32.gmra.mxu0 %v436
    %v507 = vpop.f32.mrf.mxu0
    %v508 = vadd.f32 %v434, %v507
    %v509 = vpop.f32.mrf.mxu0
    %510 = vmatprep.mubr.f32.mxu0 0.0
    %511 = vmatmul.mubr.f32.gmra.mxu0 %v439
    %v512 = vpop.f32.mrf.mxu0
    %v513 = vadd.f32 %v434, %v512
    %v514 = vpop.f32.mrf.mxu0
    %515 = vdwg.mxu0
    %v516 = vadd.f32 %v35, %v508
    %v517 = vadd.f32 %v36, %v513
    %v518 = vld [vmem:[%s3 + $0x4] sm:$0x1]
    %v519 = vld [vmem:[%s3 + $0x5] sm:$0x1]
    %v520 = vsel %vm49, %v516, 0.0
    %521 = vadd.xlane.f32.xlu0 %v520
    %v522 = vpop.xlane.xlu0 %521
    %v523 = vsel %vm49, %v517, 0.0
    %524 = vadd.xlane.f32.xlu0 %v523
    %v525 = vpop.xlane.xlu0 %524
    %v526 = vrcp.pop 32.0
    %v527 = vmul.f32 %v522, %v526
    %v528 = vmul.f32 %v525, %v526
    %v529 = vsub.f32 %v516, %v527
    %v530 = vsub.f32 %v517, %v528
    %v531 = vmul.f32 %v529, %v529
    %v532 = vmul.f32 %v530, %v530
    %v533 = vsel %vm49, %v531, 0.0
    %534 = vadd.xlane.f32.xlu0 %v533
    %v535 = vpop.xlane.xlu0 %534
    %v536 = vsel %vm49, %v532, 0.0
    %537 = vadd.xlane.f32.xlu0 %v536
    %v538 = vpop.xlane.xlu0 %537
    %v539 = vmul.f32 %v535, %v526
    %v540 = vmul.f32 %v538, %v526
    %v541 = vadd.f32 %v539, 1e-05
    %v542 = vadd.f32 %v540, 1e-05
    %v543 = vrsqrt.pop %v541
    %v544 = vrsqrt.pop %v542
    %v545 = vmul.f32 %v529, %v543
    %v546 = vmul.f32 %v530, %v544
    %v547 = vlaneseq
    %v548 = vshrl.u32 %v547, 7
    %v549 = vsub.s32 0, %v548
    %v550 = vrot.slane %v518, %v549
    %v551 = vmul.f32 %v545, %v550
    %v552 = vmul.f32 %v546, %v550
    %v553 = vlaneseq
    %v554 = vshrl.u32 %v553, 7
    %v555 = vsub.s32 0, %v554
    %v556 = vrot.slane %v519, %v555
    %v557 = vadd.f32 %v551, %v556
    %v558 = vadd.f32 %v552, %v556
    %v559 = vld [vmem:[#allocation2 + $0x20] sm:$0xff]
    %v560 = vld [vmem:[#allocation2 + $0x50] sm:$0xff]
    %v561 = vld [vmem:[#allocation2 + $0x80] sm:$0xff]
    %v562 = vld [vmem:[#allocation2 + $0xb0] sm:$0xff]
    %v563 = vld [vmem:[%s3 + $0x6] sm:$0x1]
    %v564 = vlaneseq
    %v565 = vshrl.u32 %v564, 7
    %v566 = vsub.s32 0, %v565
    %v567 = vrot.slane %v563, %v566
    %v569 = vsel %vm49, %v557, 0
    %v572 = vsel %vm49, %v558, 0
    %574 = vmatprep.subr.mxu0 0.0
    %575 = vmatpush1.msra.mxu0 0.0
    %576 = vmatprep.subr.mxu0 0.0
    %577 = vmatpush1.msra.mxu0 0.0
    %578 = vmatprep.subr.mxu0 0.0
    %579 = vmatpush1.msra.mxu0 0.0
    %580 = vmatprep.subr.mxu0 0.0
    %581 = vmatpush1.msra.mxu0 0.0
    %582 = vmatprep.subr.mxu0 0.0
    %583 = vmatpush1.msra.mxu0 0.0
    %584 = vmatprep.subr.mxu0 0.0
    %585 = vmatpush1.msra.mxu0 0.0
    %586 = vmatprep.subr.mxu0 0.0
    %587 = vmatpush1.msra.mxu0 0.0
    %588 = vmatprep.subr.mxu0 0.0
    %589 = vmatpush1.msra.mxu0 0.0
    %590 = vmatprep.subr.mxu0 0.0
    %591 = vmatpush1.msra.mxu0 0.0
    %592 = vmatprep.subr.mxu0 0.0
    %593 = vmatpush1.msra.mxu0 0.0
    %594 = vmatprep.subr.mxu0 0.0
    %595 = vmatpush1.msra.mxu0 0.0
    %596 = vmatprep.subr.mxu0 0.0
    %597 = vmatpush1.msra.mxu0 0.0
    %598 = vmatprep.subr.mxu0 0.0
    %599 = vmatpush1.msra.mxu0 %v562
    %600 = vmatprep.subr.mxu0 0.0
    %601 = vmatpush1.msra.mxu0 %v561
    %602 = vmatprep.subr.mxu0 0.0
    %603 = vmatpush1.msra.mxu0 %v560
    %604 = vmatprep.subr.mxu0 0.0
    %605 = vmatpush1.msra.mxu0 %v559
    %606 = vmatprep.subr.mxu0 0.0
    %607 = vmatpush2.msra.mxu0 0.0
    %608 = vmatprep.subr.mxu0 0.0
    %609 = vmatpush2.msra.mxu0 0.0
    %610 = vmatprep.subr.mxu0 0.0
    %611 = vmatpush2.msra.mxu0 0.0
    %612 = vmatprep.subr.mxu0 0.0
    %613 = vmatpush2.msra.mxu0 0.0
    %614 = vmatprep.subr.mxu0 0.0
    %615 = vmatpush2.msra.mxu0 0.0
    %616 = vmatprep.subr.mxu0 0.0
    %617 = vmatpush2.msra.mxu0 0.0
    %618 = vmatprep.subr.mxu0 0.0
    %619 = vmatpush2.msra.mxu0 0.0
    %620 = vmatprep.subr.mxu0 0.0
    %621 = vmatpush2.msra.mxu0 0.0
    %622 = vmatprep.subr.mxu0 0.0
    %623 = vmatpush2.msra.mxu0 0.0
    %624 = vmatprep.subr.mxu0 0.0
    %625 = vmatpush2.msra.mxu0 0.0
    %626 = vmatprep.subr.mxu0 0.0
    %627 = vmatpush2.msra.mxu0 0.0
    %628 = vmatprep.subr.mxu0 0.0
    %629 = vmatpush2.msra.mxu0 0.0
    %630 = vmatprep.subr.mxu0 0.0
    %631 = vmatpush2.msra.mxu0 0.0
    %632 = vmatprep.subr.mxu0 0.0
    %633 = vmatpush2.msra.mxu0 0.0
    %634 = vmatprep.subr.mxu0 0.0
    %635 = vmatpush2.msra.mxu0 0.0
    %636 = vmatprep.subr.mxu0 0.0
    %637 = vmatpush2.msra.mxu0 0.0
    %638 = vmatprep.mubr.f32.mxu0 0.0
    %639 = vmatmul.mubr.f32.gmra.mxu0 %v569
    %v640 = vpop.f32.mrf.mxu0
    %v641 = vadd.f32 %v567, %v640
    %v642 = vpop.f32.mrf.mxu0
    %643 = vmatprep.mubr.f32.mxu0 0.0
    %644 = vmatmul.mubr.f32.gmra.mxu0 %v572
    %v645 = vpop.f32.mrf.mxu0
    %v646 = vadd.f32 %v567, %v645
    %v647 = vpop.f32.mrf.mxu0
    %648 = vdwg.mxu0
    %v649 = vmul.f32 %v641, %v641
    %v650 = vmul.f32 %v646, %v646
    %v651 = vmul.f32 %v641, %v649
    %v652 = vmul.f32 %v646, %v650
    %v653 = vmul.f32 %v651, 0.044715
    %v654 = vmul.f32 %v652, 0.044715
    %v655 = vadd.f32 %v641, %v653
    %v656 = vadd.f32 %v646, %v654
    %v657 = vmul.f32 %v655, 0.7978846
    %v658 = vmul.f32 %v656, 0.7978846
    %v659 = vtanh.pop %v657
    %v660 = vtanh.pop %v658
    %v661 = vadd.f32 %v659, 1.0
    %v662 = vadd.f32 %v660, 1.0
    %v663 = vmul.f32 %v661, 0.5
    %v664 = vmul.f32 %v662, 0.5
    %v665 = vmul.f32 %v641, %v663
    %v666 = vmul.f32 %v646, %v664
    %v667 = vld [vmem:[%s2] sm:$0xff]
    %v668 = vld [vmem:[%s2 + $0x8] sm:$0xff]
    %v669 = vld [vmem:[%s2 + $0x10] sm:$0xff]
    %v670 = vld [vmem:[%s2 + $0x18] sm:$0xff]
    %v671 = vld [vmem:[%s2 + $0x20] sm:$0xff]
    %v672 = vld [vmem:[%s2 + $0x28] sm:$0xff]
    %v673 = vld [vmem:[%s2 + $0x30] sm:$0xff]
    %v674 = vld [vmem:[%s2 + $0x38] sm:$0xff]
    %v675 = vld [vmem:[%s3 + $0x7] sm:$0x1]
    %v676 = vlaneseq
    %v677 = vshrl.u32 %v676, 7
    %v678 = vsub.s32 0, %v677
    %v679 = vrot.slane %v675, %v678
    %vm680 = vcmask 523264
    %v682 = vsel %vm680, %v665, 0
    %v685 = vsel %vm680, %v666, 0
    %687 = vmatprep.subr.mxu0 0.0
    %688 = vmatpush1.msra.mxu0 0.0
    %689 = vmatprep.subr.mxu0 0.0
    %690 = vmatpush1.msra.mxu0 0.0
    %691 = vmatprep.subr.mxu0 0.0
    %692 = vmatpush1.msra.mxu0 0.0
    %693 = vmatprep.subr.mxu0 0.0
    %694 = vmatpush1.msra.mxu0 0.0
    %695 = vmatprep.subr.mxu0 0.0
    %696 = vmatpush1.msra.mxu0 0.0
    %697 = vmatprep.subr.mxu0 0.0
    %698 = vmatpush1.msra.mxu0 0.0
    %699 = vmatprep.subr.mxu0 0.0
    %700 = vmatpush1.msra.mxu0 0.0
    %701 = vmatprep.subr.mxu0 0.0
    %702 = vmatpush1.msra.mxu0 0.0
    %703 = vmatprep.subr.mxu0 0.0
    %704 = vmatpush1.msra.mxu0 %v674
    %705 = vmatprep.subr.mxu0 0.0
    %706 = vmatpush1.msra.mxu0 %v673
    %707 = vmatprep.subr.mxu0 0.0
    %708 = vmatpush1.msra.mxu0 %v672
    %709 = vmatprep.subr.mxu0 0.0
    %710 = vmatpush1.msra.mxu0 %v671
    %711 = vmatprep.subr.mxu0 0.0
    %712 = vmatpush1.msra.mxu0 %v670
    %713 = vmatprep.subr.mxu0 0.0
    %714 = vmatpush1.msra.mxu0 %v669
    %715 = vmatprep.subr.mxu0 0.0
    %716 = vmatpush1.msra.mxu0 %v668
    %717 = vmatprep.subr.mxu0 0.0
    %718 = vmatpush1.msra.mxu0 %v667
    %719 = vmatprep.subr.mxu0 0.0
    %720 = vmatpush2.msra.mxu0 0.0
    %721 = vmatprep.subr.mxu0 0.0
    %722 = vmatpush2.msra.mxu0 0.0
    %723 = vmatprep.subr.mxu0 0.0
    %724 = vmatpush2.msra.mxu0 0.0
    %725 = vmatprep.subr.mxu0 0.0
    %726 = vmatpush2.msra.mxu0 0.0
    %727 = vmatprep.subr.mxu0 0.0
    %728 = vmatpush2.msra.mxu0 0.0
    %729 = vmatprep.subr.mxu0 0.0
    %730 = vmatpush2.msra.mxu0 0.0
    %731 = vmatprep.subr.mxu0 0.0
    %732 = vmatpush2.msra.mxu0 0.0
    %733 = vmatprep.subr.mxu0 0.0
    %734 = vmatpush2.msra.mxu0 0.0
    %735 = vmatprep.subr.mxu0 0.0
    %736 = vmatpush2.msra.mxu0 0.0
    %737 = vmatprep.subr.mxu0 0.0
    %738 = vmatpush2.msra.mxu0 0.0
    %739 = vmatprep.subr.mxu0 0.0
    %740 = vmatpush2.msra.mxu0 0.0
    %741 = vmatprep.subr.mxu0 0.0
    %742 = vmatpush2.msra.mxu0 0.0
    %743 = vmatprep.subr.mxu0 0.0
    %744 = vmatpush2.msra.mxu0 0.0
    %745 = vmatprep.subr.mxu0 0.0
    %746 = vmatpush2.msra.mxu0 0.0
    %747 = vmatprep.subr.mxu0 0.0
    %748 = vmatpush2.msra.mxu0 0.0
    %749 = vmatprep.subr.mxu0 0.0
    %750 = vmatpush2.msra.mxu0 0.0
    %751 = vmatprep.mubr.f32.mxu0 0.0
    %752 = vmatmul.mubr.f32.gmra.mxu0 %v682
    %v753 = vpop.f32.mrf.mxu0
    %v754 = vadd.f32 %v679, %v753
    %v755 = vpop.f32.mrf.mxu0
    %756 = vmatprep.mubr.f32.mxu0 0.0
    %757 = vmatmul.mubr.f32.gmra.mxu0 %v685
    %v758 = vpop.f32.mrf.mxu0
    %v759 = vadd.f32 %v679, %v758
    %v760 = vpop.f32.mrf.mxu0
    %761 = vdwg.mxu0
    %v762 = vadd.f32 %v557, %v754
    %v763 = vadd.f32 %v558, %v759
    %v764 = vld [vmem:[%s3 + $0x8] sm:$0x1]
    %v765 = vld [vmem:[%s3 + $0x9] sm:$0x1]
    %v766 = vsel %vm49, %v762, 0.0
    %767 = vadd.xlane.f32.xlu0 %v766
    %v768 = vpop.xlane.xlu0 %767
    %v769 = vsel %vm49, %v763, 0.0
    %770 = vadd.xlane.f32.xlu0 %v769
    %v771 = vpop.xlane.xlu0 %770
    %v772 = vmul.f32 %v768, %v526
    %v773 = vmul.f32 %v771, %v526
    %v774 = vsub.f32 %v762, %v772
    %v775 = vsub.f32 %v763, %v773
    %v776 = vmul.f32 %v774, %v774
    %v777 = vmul.f32 %v775, %v775
    %v778 = vsel %vm49, %v776, 0.0
    %779 = vadd.xlane.f32.xlu0 %v778
    %v780 = vpop.xlane.xlu0 %779
    %v781 = vsel %vm49, %v777, 0.0
    %782 = vadd.xlane.f32.xlu0 %v781
    %v783 = vpop.xlane.xlu0 %782
    %v784 = vmul.f32 %v780, %v526
    %v785 = vmul.f32 %v783, %v526
    %v786 = vadd.f32 %v784, 1e-05
    %v787 = vadd.f32 %v785, 1e-05
    %v788 = vrsqrt.pop %v786
    %v789 = vrsqrt.pop %v787
    %v790 = vmul.f32 %v774, %v788
    %v791 = vmul.f32 %v775, %v789
    %v792 = vlaneseq
    %v793 = vshrl.u32 %v792, 7
    %v794 = vsub.s32 0, %v793
    %v795 = vrot.slane %v764, %v794
    %v796 = vmul.f32 %v790, %v795
    %v797 = vmul.f32 %v791, %v795
    %v798 = vlaneseq
    %v799 = vshrl.u32 %v798, 7
    %v800 = vsub.s32 0, %v799
    %v801 = vrot.slane %v765, %v800
    %v802 = vadd.f32 %v796, %v801
    %v803 = vadd.f32 %v797, %v801
    %v804 = vld [vmem:[%s3 + $0xd] sm:$0x3]
    %v806 = vsel %vm322, %v804, 0
    %808 = vmatprep.subr.mxu0 0.0
    %809 = vmatpush1.msra.mxu0 0.0
    %810 = vmatprep.subr.mxu0 0.0
    %811 = vmatpush1.msra.mxu0 0.0
    %812 = vmatprep.subr.mxu0 0.0
    %813 = vmatpush1.msra.mxu0 0.0
    %814 = vmatprep.subr.mxu0 0.0
    %815 = vmatpush1.msra.mxu0 0.0
    %816 = vmatprep.subr.mxu0 0.0
    %817 = vmatpush1.msra.mxu0 0.0
    %818 = vmatprep.subr.mxu0 0.0
    %819 = vmatpush1.msra.mxu0 0.0
    %820 = vmatprep.subr.mxu0 0.0
    %821 = vmatpush1.msra.mxu0 0.0
    %822 = vmatprep.subr.mxu0 0.0
    %823 = vmatpush1.msra.mxu0 0.0
    %824 = vmatprep.subr.mxu0 0.0
    %825 = vmatpush1.msra.mxu0 0.0
    %826 = vmatprep.subr.mxu0 0.0
    %827 = vmatpush1.msra.mxu0 0.0
    %828 = vmatprep.subr.mxu0 0.0
    %829 = vmatpush1.msra.mxu0 0.0
    %830 = vmatprep.subr.mxu0 0.0
    %831 = vmatpush1.msra.mxu0 0.0
    %832 = vmatprep.subr.mxu0 0.0
    %833 = vmatpush1.msra.mxu0 0.0
    %834 = vmatprep.subr.mxu0 0.0
    %835 = vmatpush1.msra.mxu0 0.0
    %836 = vmatprep.subr.mxu0 0.0
    %837 = vmatpush1.msra.mxu0 %v803
    %838 = vmatprep.subr.mxu0 0.0
    %839 = vmatpush1.msra.mxu0 %v802
    %840 = vmatprep.subr.mxu0 0.0
    %841 = vmatpush2.msra.mxu0 0.0
    %842 = vmatprep.subr.mxu0 0.0
    %843 = vmatpush2.msra.mxu0 0.0
    %844 = vmatprep.subr.mxu0 0.0
    %845 = vmatpush2.msra.mxu0 0.0
    %846 = vmatprep.subr.mxu0 0.0
    %847 = vmatpush2.msra.mxu0 0.0
    %848 = vmatprep.subr.mxu0 0.0
    %849 = vmatpush2.msra.mxu0 0.0
    %850 = vmatprep.subr.mxu0 0.0
    %851 = vmatpush2.msra.mxu0 0.0
    %852 = vmatprep.subr.mxu0 0.0
    %853 = vmatpush2.msra.mxu0 0.0
    %854 = vmatprep.subr.mxu0 0.0
    %855 = vmatpush2.msra.mxu0 0.0
    %856 = vmatprep.subr.mxu0 0.0
    %857 = vmatpush2.msra.mxu0 0.0
    %858 = vmatprep.subr.mxu0 0.0
    %859 = vmatpush2.msra.mxu0 0.0
    %860 = vmatprep.subr.mxu0 0.0
    %861 = vmatpush2.msra.mxu0 0.0
    %862 = vmatprep.subr.mxu0 0.0
    %863 = vmatpush2.msra.mxu0 0.0
    %864 = vmatprep.subr.mxu0 0.0
    %865 = vmatpush2.msra.mxu0 0.0
    %866 = vmatprep.subr.mxu0 0.0
    %867 = vmatpush2.msra.mxu0 0.0
    %868 = vmatprep.subr.mxu0 0.0
    %869 = vmatpush2.msra.mxu0 0.0
    %870 = vmatprep.subr.mxu0 0.0
    %871 = vmatpush2.msra.mxu0 0.0
    %872 = vmatprep.mubr.f32.mxu0 0.0
    %873 = vmatmul.mubr.f32.gmra.mxu0 %v806
    %v874 = vpop.f32.mrf.mxu0
    %v875 = vadd.f32 0.0, %v874
    %v876 = vpop.f32.mrf.mxu0
    %877 = vdwg.mxu0
    %v878 = vld [vmem:[#allocation2 + $0x28] sm:$0xff]
    %v879 = vld [vmem:[#allocation2 + $0x58] sm:$0xff]
    %v880 = vld [vmem:[#allocation2 + $0x88] sm:$0xff]
    %v881 = vld [vmem:[#allocation2 + $0xb8] sm:$0xff]
    %v882 = vld [vmem:[%s3 + $0xa] sm:$0x1]
    %v883 = vlaneseq
    %v884 = vshrl.u32 %v883, 7
    %v885 = vsub.s32 0, %v884
    %v886 = vrot.slane %v882, %v885
    %v888 = vsel %vm49, %v875, 0
    %890 = vmatprep.subr.mxu0 0.0
    %891 = vmatpush1.msra.mxu0 0.0
    %892 = vmatprep.subr.mxu0 0.0
    %893 = vmatpush1.msra.mxu0 0.0
    %894 = vmatprep.subr.mxu0 0.0
    %895 = vmatpush1.msra.mxu0 0.0
    %896 = vmatprep.subr.mxu0 0.0
    %897 = vmatpush1.msra.mxu0 0.0
    %898 = vmatprep.subr.mxu0 0.0
    %899 = vmatpush1.msra.mxu0 0.0
    %900 = vmatprep.subr.mxu0 0.0
    %901 = vmatpush1.msra.mxu0 0.0
    %902 = vmatprep.subr.mxu0 0.0
    %903 = vmatpush1.msra.mxu0 0.0
    %904 = vmatprep.subr.mxu0 0.0
    %905 = vmatpush1.msra.mxu0 0.0
    %906 = vmatprep.subr.mxu0 0.0
    %907 = vmatpush1.msra.mxu0 0.0
    %908 = vmatprep.subr.mxu0 0.0
    %909 = vmatpush1.msra.mxu0 0.0
    %910 = vmatprep.subr.mxu0 0.0
    %911 = vmatpush1.msra.mxu0 0.0
    %912 = vmatprep.subr.mxu0 0.0
    %913 = vmatpush1.msra.mxu0 0.0
    %914 = vmatprep.subr.mxu0 0.0
    %915 = vmatpush1.msra.mxu0 %v881
    %916 = vmatprep.subr.mxu0 0.0
    %917 = vmatpush1.msra.mxu0 %v880
    %918 = vmatprep.subr.mxu0 0.0
    %919 = vmatpush1.msra.mxu0 %v879
    %920 = vmatprep.subr.mxu0 0.0
    %921 = vmatpush1.msra.mxu0 %v878
    %922 = vmatprep.subr.mxu0 0.0
    %923 = vmatpush2.msra.mxu0 0.0
    %924 = vmatprep.subr.mxu0 0.0
    %925 = vmatpush2.msra.mxu0 0.0
    %926 = vmatprep.subr.mxu0 0.0
    %927 = vmatpush2.msra.mxu0 0.0
    %928 = vmatprep.subr.mxu0 0.0
    %929 = vmatpush2.msra.mxu0 0.0
    %930 = vmatprep.subr.mxu0 0.0
    %931 = vmatpush2.msra.mxu0 0.0
    %932 = vmatprep.subr.mxu0 0.0
    %933 = vmatpush2.msra.mxu0 0.0
    %934 = vmatprep.subr.mxu0 0.0
    %935 = vmatpush2.msra.mxu0 0.0
    %936 = vmatprep.subr.mxu0 0.0
    %937 = vmatpush2.msra.mxu0 0.0
    %938 = vmatprep.subr.mxu0 0.0
    %939 = vmatpush2.msra.mxu0 0.0
    %940 = vmatprep.subr.mxu0 0.0
    %941 = vmatpush2.msra.mxu0 0.0
    %942 = vmatprep.subr.mxu0 0.0
    %943 = vmatpush2.msra.mxu0 0.0
    %944 = vmatprep.subr.mxu0 0.0
    %945 = vmatpush2.msra.mxu0 0.0
    %946 = vmatprep.subr.mxu0 0.0
    %947 = vmatpush2.msra.mxu0 0.0
    %948 = vmatprep.subr.mxu0 0.0
    %949 = vmatpush2.msra.mxu0 0.0
    %950 = vmatprep.subr.mxu0 0.0
    %951 = vmatpush2.msra.mxu0 0.0
    %952 = vmatprep.subr.mxu0 0.0
    %953 = vmatpush2.msra.mxu0 0.0
    %954 = vmatprep.mubr.f32.mxu0 0.0
    %955 = vmatmul.mubr.f32.gmra.mxu0 %v888
    %v956 = vpop.f32.mrf.mxu0
    %v957 = vadd.f32 %v886, %v956
    %v958 = vpop.f32.mrf.mxu0
    %959 = vdwg.mxu0
    %v960 = vld [vmem:[%s3 + $0xb] sm:$0x1]
    %v961 = vlaneseq
    %v962 = vshrl.u32 %v961, 7
    %v963 = vsub.s32 0, %v962
    %v964 = vrot.slane %v960, %v963
    %v965 = vmul.f32 %v957, %v964
    %vm966 = vcmask 1041408
    %v967 = vsel %vm966, %v965, 0.0
    %968 = vadd.xlane.f32.xlu0 %v967
    %v969 = vpop.xlane.xlu0 %968
    %v970 = vld [vmem:[%s3 + $0xc] sm:$0x1]
    %v971 = vlaneseq
    %v972 = vshrl.u32 %v971, 7
    %v973 = vsub.s32 0, %v972
    %v974 = vrot.slane %v970, %v973
    %v975 = vadd.f32 %v969, %v974
    %v976 = vld [vmem:[%s4] sm:$0x3]
    %978 = vrot.lane.b32.xlu0 %v976, 112
    %v979 = vpop.permute.xlu0 %978
    %v981 = vsub.f32 %v975, %v979
    %v982 = vmul.f32 %v981, %v981
    %vm983 = vcmask 1024
    %v984 = vsel %vm983, %v982, 0.0
    %985 = vadd.xlane.f32.xlu0 %v984
    %v986 = vpop.xlane.xlu0 %985
    %v987 = vrot.slane %v986, 4
    %v988 = vadd.f32 %v986, %v987
    %v989 = vrot.slane %v988, 2
    %v990 = vadd.f32 %v988, %v989
    %v991 = vrot.slane %v990, 1
    %v992 = vadd.f32 %v990, %v991
    %s993 = vtos %v992
    %v994 = vstv %s993
    %v995 = vmul.f32 %v994, 0.5
    %996 = vst [vmem:[#allocation5] sm:$0x3] %v957
    %998 = vset.pattern.permute.xlu0 0
    %999 = vperm.xlu0 %998, %v975
    %v1000 = vpop.permute.xlu0 %999
    %1002 = vst [vmem:[#allocation5 + $0x2] sm:$0x3] %v1000
    %1003 = vst [vmem:[#allocation5 + $0x4] sm:$0xf] %v995
    // Predicated region
    $region26: #{tpu_custom_call.1} parent=1 // pred_check
      _
    $region27: #{tpu_custom_call.1} parent=1 // pred_check_branch
      %1005 = sbr.rel (0) target = $region29
    $region28: #{tpu_custom_call.1} parent=1 // pred_region
      %s1007 = ssub.s32 128, 128
      %1008 = vsyncadd [#allocation4], %s1007
      %s1010 = sshll.u32 [#allocation5], 4
      %s1011 = int_to_ptr.vmem [resolvable:$true] %s1010
      %1013 = dma.vmem_to_hbm [thread:$0]  %s1011, 128, %s5, [#allocation4]
    $region29: #{tpu_custom_call.1} parent=1 // pred_fallthru
      _
    // Predicated region
    $region30: #{tpu_custom_call.1} parent=1 // pred_check
      _
    $region31: #{tpu_custom_call.1} parent=1 // pred_check_branch
      %1015 = sbr.rel (0) target = $region33
    $region32: #{tpu_custom_call.1} parent=1 // pred_region
      %1016 = dma.done [#allocation4], 128
    $region33: #{tpu_custom_call.1} parent=1 // pred_fallthru
      _
    %1017 = vsyncpa [#allocation3], 1
    %1018 = vsyncpa [#allocation4], 1

</llo_original>
